<compile_context>
chip_gen: v6e
topology: v6e:2x2x1
jax: 0.10.0
libtpu: 0.0.40
codegen_flags: <defaults>
</compile_context>

<pallas_src>
import jax
import jax.numpy as jnp
from jax.experimental import pallas as pl
from jax.experimental.pallas import tpu as pltpu

# ---------------- model dims ----------------
B = 2          # batch
T = 8          # sequence length
IN = 32        # input_size
H = 32         # hidden_size
OUT = 16       # output_size  (!= H -> LayerNorm + out_proj used)
CH = 24        # context_hidden_size
LN_EPS = 1e-3


def grn_kernel(ac_ref,                   # (B*T, IN+CH)  [a | context broadcast over T]
               wf_ref, bf_ref,           # fused [[wa|wout],[wc|0]]: (IN+CH, H+OUT), (1, H+OUT)
               wi_ref, bi_ref,           # lin_i: (H, H), (1, H)
               wglu_ref, bglu_ref,       # glu.lin: (H, 2*OUT), (1, 2*OUT)
               gamma_ref, beta_ref,      # layer_norm affine: (1, OUT), (1, OUT)
               o_ref):                   # (B*T, OUT)
    ac = ac_ref[...]                     # (B*T, IN+CH) f32

    # Single fused MXU push: [lin_a(a) + lin_c(c) + b_a | out_proj(a) + b_out]
    af = jnp.dot(ac, wf_ref[...], preferred_element_type=jnp.float32) + bf_ref[...]
    x = af[:, :H]                        # hidden branch   (B*T, H)
    y = af[:, H:]                        # residual branch (B*T, OUT)

    # ELU (alpha=1).  (exp(x)-1 kept rather than expm1 for guaranteed lowering.)
    x = jnp.where(x > 0, x, jnp.exp(x) - 1.0)

    # lin_i
    x = jnp.dot(x, wi_ref[...], preferred_element_type=jnp.float32) + bi_ref[...]

    # TODO(synk): dropout is identity here (p=0 / eval mode), so it is omitted.

    # GLU: lin -> split -> a * sigmoid(b), then residual add.
    g = jnp.dot(x, wglu_ref[...], preferred_element_type=jnp.float32) + bglu_ref[...]
    x = g[:, :OUT] * jax.nn.sigmoid(g[:, OUT:]) + y

    # LayerNorm over last dim, eps=1e-3 (one-pass variance).
    mean = jnp.mean(x, axis=-1, keepdims=True)
    meansq = jnp.mean(x * x, axis=-1, keepdims=True)
    var = meansq - mean * mean
    x = (x - mean) * jax.lax.rsqrt(var + LN_EPS)
    o_ref[...] = (x * gamma_ref[...] + beta_ref[...]).astype(o_ref.dtype)


@jax.jit
def grn_forward(a, c, params):
    (wa, ba, wc, wi, bi, wglu, bglu, wout, bout, gamma, beta) = params
    Bc, Tc, _ = a.shape

    # Weight packing (constant-time prep): fuse all input-consuming matmuls.
    #   w_fused = [ wa  | wout ]
    #             [ wc  |  0   ]
    w_top = jnp.concatenate([wa, wout], axis=1)                              # (IN, H+OUT)
    w_bot = jnp.concatenate([wc, jnp.zeros((CH, OUT), wc.dtype)], axis=1)    # (CH, H+OUT)
    w_fused = jnp.concatenate([w_top, w_bot], axis=0)                        # (IN+CH, H+OUT)
    b_fused = jnp.concatenate([ba, bout], axis=1)                            # (1,  H+OUT)

    # Fold batch into rows; broadcast each batch's context over its T rows.
    a2d = a.reshape(Bc * Tc, IN)
    c2d = jnp.broadcast_to(c[:, None, :], (Bc, Tc, CH)).reshape(Bc * Tc, CH)
    ac = jnp.concatenate([a2d, c2d], axis=1)                                 # (B*T, IN+CH)

    vmem = lambda: pl.BlockSpec(memory_space=pltpu.MemorySpace.VMEM)

    out2d = pl.pallas_call(
        grn_kernel,
        out_shape=jax.ShapeDtypeStruct((Bc * Tc, OUT), jnp.float32),
        in_specs=[vmem() for _ in range(9)],
        out_specs=vmem(),
    )(ac, w_fused, b_fused, wi, bi, wglu, bglu, gamma, beta)

    return out2d.reshape(Bc, Tc, OUT)


def grn_reference(a, c, params):
    (wa, ba, wc, wi, bi, wglu, bglu, wout, bout, gamma, beta) = params
    x = a @ wa + ba
    x = x + (c @ wc)[:, None, :]
    x = jnp.where(x > 0, x, jnp.exp(x) - 1.0)
    x = x @ wi + bi
    g = x @ wglu + bglu
    x = g[..., :OUT] * jax.nn.sigmoid(g[..., OUT:])
    x = x + (a @ wout + bout)
    mean = jnp.mean(x, axis=-1, keepdims=True)
    var = jnp.mean((x - mean) ** 2, axis=-1, keepdims=True)
    x = (x - mean) * jax.lax.rsqrt(var + LN_EPS)
    return x * gamma + beta


def init_params(key):
    ks = jax.random.split(key, 8)
    scale = 0.1
    wa = scale * jax.random.normal(ks[0], (IN, H), jnp.float32)
    ba = scale * jax.random.normal(ks[1], (1, H), jnp.float32)
    wc = scale * jax.random.normal(ks[2], (CH, H), jnp.float32)
    wi = scale * jax.random.normal(ks[3], (H, H), jnp.float32)
    bi = scale * jax.random.normal(ks[4], (1, H), jnp.float32)
    wglu = scale * jax.random.normal(ks[5], (H, 2 * OUT), jnp.float32)
    bglu = scale * jax.random.normal(ks[6], (1, 2 * OUT), jnp.float32)
    wout = scale * jax.random.normal(ks[7], (IN, OUT), jnp.float32)
    bout = jnp.zeros((1, OUT), jnp.float32)
    gamma = jnp.ones((1, OUT), jnp.float32)
    beta = jnp.zeros((1, OUT), jnp.float32)
    return (wa, ba, wc, wi, bi, wglu, bglu, wout, bout, gamma, beta)


if __name__ == "__main__":
    key = jax.random.PRNGKey(0)
    k_a, k_c, k_p = jax.random.split(key, 3)
    a = jax.random.normal(k_a, (B, T, IN), jnp.float32)
    c = jax.random.normal(k_c, (B, CH), jnp.float32)
    params = init_params(k_p)

    out = grn_forward(a, c, params)
    out = jax.block_until_ready(out)

    ref = grn_reference(a, c, params)
    assert out.shape == (B, T, OUT)
    assert jnp.allclose(out, ref, atol=1e-4, rtol=1e-4), "mismatch vs JAX reference"

    print("KERNEL_OK")
</pallas_src>

<mosaic_0001>
module attributes {stable_mosaic.version = 11 : i64} {
  func.func @grn_kernel(%arg0: memref<16x56xf32, #tpu.memory_space<vmem>>, %arg1: memref<56x48xf32, #tpu.memory_space<vmem>>, %arg2: memref<1x48xf32, #tpu.memory_space<vmem>>, %arg3: memref<32x32xf32, #tpu.memory_space<vmem>>, %arg4: memref<1x32xf32, #tpu.memory_space<vmem>>, %arg5: memref<32x32xf32, #tpu.memory_space<vmem>>, %arg6: memref<1x32xf32, #tpu.memory_space<vmem>>, %arg7: memref<1x16xf32, #tpu.memory_space<vmem>>, %arg8: memref<1x16xf32, #tpu.memory_space<vmem>>, %arg9: memref<16x16xf32, #tpu.memory_space<vmem>>) attributes {dimension_semantics = [], scalar_prefetch = 0 : i64, scratch_operands = 0 : i64, tpu.core_type = #tpu.core_type<tc>} {
    %c0 = arith.constant 0 : index
    %c0_0 = arith.constant 0 : index
    %0 = vector.load %arg0[%c0, %c0_0] : memref<16x56xf32, #tpu.memory_space<vmem>>, vector<16x56xf32>
    %c0_1 = arith.constant 0 : index
    %c0_2 = arith.constant 0 : index
    %1 = vector.load %arg1[%c0_1, %c0_2] : memref<56x48xf32, #tpu.memory_space<vmem>>, vector<56x48xf32>
    %cst = arith.constant dense<0.000000e+00> : vector<16x48xf32>
    %2 = tpu.matmul %0, %1, %cst {dimension_numbers = #tpu.dot_dimension_numbers<[1], [0], [0], [1], [0, 0, 1, 1], [], []>} : vector<16x56xf32>, vector<56x48xf32>, vector<16x48xf32> -> vector<16x48xf32>
    %c0_3 = arith.constant 0 : index
    %c0_4 = arith.constant 0 : index
    %3 = vector.load %arg2[%c0_3, %c0_4] : memref<1x48xf32, #tpu.memory_space<vmem>>, vector<1x48xf32>
    %4 = vector.broadcast %3 : vector<1x48xf32> to vector<16x48xf32>
    %5 = arith.addf %2, %4 : vector<16x48xf32>
    %6 = vector.extract_strided_slice %5 {offsets = [0, 0], sizes = [16, 32], strides = [1, 1]} : vector<16x48xf32> to vector<16x32xf32>
    %7 = vector.extract_strided_slice %5 {offsets = [0, 32], sizes = [16, 16], strides = [1, 1]} : vector<16x48xf32> to vector<16x16xf32>
    %cst_5 = arith.constant 0.000000e+00 : f32
    %8 = vector.broadcast %cst_5 : f32 to vector<16x32xf32>
    %9 = arith.cmpf ogt, %6, %8 : vector<16x32xf32>
    %10 = math.exp %6 : vector<16x32xf32>
    %cst_6 = arith.constant 1.000000e+00 : f32
    %11 = vector.broadcast %cst_6 : f32 to vector<16x32xf32>
    %12 = arith.subf %10, %11 : vector<16x32xf32>
    %13 = arith.select %9, %6, %12 : vector<16x32xi1>, vector<16x32xf32>
    %c0_7 = arith.constant 0 : index
    %c0_8 = arith.constant 0 : index
    %14 = vector.load %arg3[%c0_7, %c0_8] : memref<32x32xf32, #tpu.memory_space<vmem>>, vector<32x32xf32>
    %cst_9 = arith.constant dense<0.000000e+00> : vector<16x32xf32>
    %15 = tpu.matmul %13, %14, %cst_9 {dimension_numbers = #tpu.dot_dimension_numbers<[1], [0], [0], [1], [0, 0, 1, 1], [], []>} : vector<16x32xf32>, vector<32x32xf32>, vector<16x32xf32> -> vector<16x32xf32>
    %c0_10 = arith.constant 0 : index
    %c0_11 = arith.constant 0 : index
    %16 = vector.load %arg4[%c0_10, %c0_11] : memref<1x32xf32, #tpu.memory_space<vmem>>, vector<1x32xf32>
    %17 = vector.broadcast %16 : vector<1x32xf32> to vector<16x32xf32>
    %18 = arith.addf %15, %17 : vector<16x32xf32>
    %c0_12 = arith.constant 0 : index
    %c0_13 = arith.constant 0 : index
    %19 = vector.load %arg5[%c0_12, %c0_13] : memref<32x32xf32, #tpu.memory_space<vmem>>, vector<32x32xf32>
    %cst_14 = arith.constant dense<0.000000e+00> : vector<16x32xf32>
    %20 = tpu.matmul %18, %19, %cst_14 {dimension_numbers = #tpu.dot_dimension_numbers<[1], [0], [0], [1], [0, 0, 1, 1], [], []>} : vector<16x32xf32>, vector<32x32xf32>, vector<16x32xf32> -> vector<16x32xf32>
    %c0_15 = arith.constant 0 : index
    %c0_16 = arith.constant 0 : index
    %21 = vector.load %arg6[%c0_15, %c0_16] : memref<1x32xf32, #tpu.memory_space<vmem>>, vector<1x32xf32>
    %22 = vector.broadcast %21 : vector<1x32xf32> to vector<16x32xf32>
    %23 = arith.addf %20, %22 : vector<16x32xf32>
    %24 = vector.extract_strided_slice %23 {offsets = [0, 0], sizes = [16, 16], strides = [1, 1]} : vector<16x32xf32> to vector<16x16xf32>
    %25 = vector.extract_strided_slice %23 {offsets = [0, 16], sizes = [16, 16], strides = [1, 1]} : vector<16x32xf32> to vector<16x16xf32>
    %26 = arith.negf %25 : vector<16x16xf32>
    %27 = math.exp %26 : vector<16x16xf32>
    %cst_17 = arith.constant 1.000000e+00 : f32
    %28 = vector.broadcast %cst_17 : f32 to vector<16x16xf32>
    %29 = arith.addf %28, %27 : vector<16x16xf32>
    %30 = arith.divf %28, %29 : vector<16x16xf32>
    %31 = arith.mulf %24, %30 : vector<16x16xf32>
    %32 = arith.addf %31, %7 : vector<16x16xf32>
    %cst_18 = arith.constant dense<0.000000e+00> : vector<16xf32>
    %33 = vector.multi_reduction <add>, %32, %cst_18 [1] : vector<16x16xf32> to vector<16xf32>
    %34 = vector.shape_cast %33 : vector<16xf32> to vector<16x1xf32>
    %cst_19 = arith.constant 1.600000e+01 : f32
    %35 = vector.broadcast %cst_19 : f32 to vector<16x1xf32>
    %36 = arith.divf %34, %35 : vector<16x1xf32>
    %37 = arith.mulf %32, %32 : vector<16x16xf32>
    %cst_20 = arith.constant dense<0.000000e+00> : vector<16xf32>
    %38 = vector.multi_reduction <add>, %37, %cst_20 [1] : vector<16x16xf32> to vector<16xf32>
    %39 = vector.shape_cast %38 : vector<16xf32> to vector<16x1xf32>
    %cst_21 = arith.constant 1.600000e+01 : f32
    %40 = vector.broadcast %cst_21 : f32 to vector<16x1xf32>
    %41 = arith.divf %39, %40 : vector<16x1xf32>
    %42 = arith.mulf %36, %36 : vector<16x1xf32>
    %43 = arith.subf %41, %42 : vector<16x1xf32>
    %44 = vector.broadcast %36 : vector<16x1xf32> to vector<16x16xf32>
    %45 = arith.subf %32, %44 : vector<16x16xf32>
    %cst_22 = arith.constant 1.000000e-03 : f32
    %46 = vector.broadcast %cst_22 : f32 to vector<16x1xf32>
    %47 = arith.addf %43, %46 : vector<16x1xf32>
    %48 = math.rsqrt %47 : vector<16x1xf32>
    %49 = vector.broadcast %48 : vector<16x1xf32> to vector<16x16xf32>
    %50 = arith.mulf %45, %49 : vector<16x16xf32>
    %c0_23 = arith.constant 0 : index
    %c0_24 = arith.constant 0 : index
    %51 = vector.load %arg7[%c0_23, %c0_24] : memref<1x16xf32, #tpu.memory_space<vmem>>, vector<1x16xf32>
    %52 = vector.broadcast %51 : vector<1x16xf32> to vector<16x16xf32>
    %53 = arith.mulf %50, %52 : vector<16x16xf32>
    %c0_25 = arith.constant 0 : index
    %c0_26 = arith.constant 0 : index
    %54 = vector.load %arg8[%c0_25, %c0_26] : memref<1x16xf32, #tpu.memory_space<vmem>>, vector<1x16xf32>
    %55 = vector.broadcast %54 : vector<1x16xf32> to vector<16x16xf32>
    %56 = arith.addf %53, %55 : vector<16x16xf32>
    %c0_27 = arith.constant 0 : index
    %c0_28 = arith.constant 0 : index
    %57 = vector.load %arg9[%c0_27, %c0_28] : memref<16x16xf32, #tpu.memory_space<vmem>>, vector<16x16xf32>
    tpu.vector_store %arg9[%c0_27, %c0_28], %56 {strides = array<i32>} : memref<16x16xf32, #tpu.memory_space<vmem>>, vector<16x16xf32>,
    return
  }
}

</mosaic_0001>

<llo_original>
// kernel: grn_forward.1
$region0: #{grn_forward.1}
  #allocation0 [shape = 'u32[]', space=smem, size = 0x4, offset = 0x4, fixed_abs, tag = 'smem constant byte address 0x4 - core index']
  #allocation1 [shape = 'u32[144,128]{1,0:T(1,128)}', space=vmem, size = 0x12000, scoped, tag = 'internal scratch']
  %s0 = inlined_call_operand.vmem [shape: f32[16,56], index: 0, kind: input, shape index: {}]
  %s1 = inlined_call_operand.vmem [shape: f32[56,48], index: 1, kind: input, shape index: {}]
  %s2 = inlined_call_operand.vmem [shape: f32[1,48], index: 2, kind: input, shape index: {}]
  %s3 = inlined_call_operand.vmem [shape: f32[32,32], index: 3, kind: input, shape index: {}]
  %s4 = inlined_call_operand.vmem [shape: f32[1,32], index: 4, kind: input, shape index: {}]
  %s5 = inlined_call_operand.vmem [shape: f32[32,32], index: 5, kind: input, shape index: {}]
  %s6 = inlined_call_operand.vmem [shape: f32[1,32], index: 6, kind: input, shape index: {}]
  %s7 = inlined_call_operand.vmem [shape: f32[1,16], index: 7, kind: input, shape index: {}]
  %s8 = inlined_call_operand.vmem [shape: f32[1,16], index: 8, kind: input, shape index: {}]
  %s9 = inlined_call_operand.hbm [shape: f32[16,16], index: 9, kind: output, shape index: {}]
  %s10 = sld [smem:[#allocation0]]
  $region46: #{grn_forward.1} parent=0
    _
  %s12 = ssub.s32 1, %s10
  %s13 = scalar_select 0, %s12, %s10
  $region1: #{grn_forward.1} parent=0
    #allocation2 [shape = 'u8[8192]{0}', space=vmem, size = 0x2000, scoped, tag = 'output window, operand 0, single buffered']
    #allocation3 [shape = 's32[1]{0}', space=sflag, size = 0x4, scoped, tag = 'scoped memory for grn_forward.1']
    %14 = vsyncpa [#allocation3], 0
    // Predicated region
    $region2: #{grn_forward.1} parent=1 // pred_check
      _
    $region3: #{grn_forward.1} parent=1 // pred_check_branch
      %16 = sbr.rel (0) target = $region5
    $region4: #{grn_forward.1} parent=1 // pred_region
      _
    $region5: #{grn_forward.1} parent=1 // pred_fallthru
      _
    // Predicated region
    $region6: #{grn_forward.1} parent=1 // pred_check
      _
    $region7: #{grn_forward.1} parent=1 // pred_check_branch
      %18 = sbr.rel (0) target = $region9
    $region8: #{grn_forward.1} parent=1 // pred_region
      _
    $region9: #{grn_forward.1} parent=1 // pred_fallthru
      _
    // Predicated region
    $region10: #{grn_forward.1} parent=1 // pred_check
      _
    $region11: #{grn_forward.1} parent=1 // pred_check_branch
      %20 = sbr.rel (0) target = $region13
    $region12: #{grn_forward.1} parent=1 // pred_region
      _
    $region13: #{grn_forward.1} parent=1 // pred_fallthru
      _
    // Predicated region
    $region14: #{grn_forward.1} parent=1 // pred_check
      _
    $region15: #{grn_forward.1} parent=1 // pred_check_branch
      %22 = sbr.rel (0) target = $region17
    $region16: #{grn_forward.1} parent=1 // pred_region
      _
    $region17: #{grn_forward.1} parent=1 // pred_fallthru
      _
    // Predicated region
    $region18: #{grn_forward.1} parent=1 // pred_check
      _
    $region19: #{grn_forward.1} parent=1 // pred_check_branch
      %24 = sbr.rel (0) target = $region21
    $region20: #{grn_forward.1} parent=1 // pred_region
      _
    $region21: #{grn_forward.1} parent=1 // pred_fallthru
      _
    // Predicated region
    $region22: #{grn_forward.1} parent=1 // pred_check
      _
    $region23: #{grn_forward.1} parent=1 // pred_check_branch
      %26 = sbr.rel (0) target = $region25
    $region24: #{grn_forward.1} parent=1 // pred_region
      _
    $region25: #{grn_forward.1} parent=1 // pred_fallthru
      _
    // Predicated region
    $region26: #{grn_forward.1} parent=1 // pred_check
      _
    $region27: #{grn_forward.1} parent=1 // pred_check_branch
      %28 = sbr.rel (0) target = $region29
    $region28: #{grn_forward.1} parent=1 // pred_region
      _
    $region29: #{grn_forward.1} parent=1 // pred_fallthru
      _
    // Predicated region
    $region30: #{grn_forward.1} parent=1 // pred_check
      _
    $region31: #{grn_forward.1} parent=1 // pred_check_branch
      %30 = sbr.rel (0) target = $region33
    $region32: #{grn_forward.1} parent=1 // pred_region
      _
    $region33: #{grn_forward.1} parent=1 // pred_fallthru
      _
    // Predicated region
    $region34: #{grn_forward.1} parent=1 // pred_check
      _
    $region35: #{grn_forward.1} parent=1 // pred_check_branch
      %32 = sbr.rel (0) target = $region37
    $region36: #{grn_forward.1} parent=1 // pred_region
      _
    $region37: #{grn_forward.1} parent=1 // pred_fallthru
      _
    %v33 = vld [vmem:[%s0] sm:$0xff]
    %v34 = vld [vmem:[%s0 + $0x8] sm:$0xff]
    %v35 = vld [vmem:[%s1] sm:$0xff]
    %v36 = vld [vmem:[%s1 + $0x8] sm:$0xff]
    %v37 = vld [vmem:[%s1 + $0x10] sm:$0xff]
    %v38 = vld [vmem:[%s1 + $0x18] sm:$0xff]
    %v39 = vld [vmem:[%s1 + $0x20] sm:$0xff]
    %v40 = vld [vmem:[%s1 + $0x28] sm:$0xff]
    %v41 = vld [vmem:[%s1 + $0x30] sm:$0xff]
    %v42 = vld [vmem:[%s2] sm:$0x1]
    %v44 = vlaneseq
    %v45 = vshrl.u32 %v44, 7
    %v46 = vsub.s32 0, %v45
    %v47 = vrot.slane %v42, %v46
    %vm49 = vcmask 457728
    %v51 = vsel %vm49, %v33, 0
    %v54 = vsel %vm49, %v34, 0
    %56 = vmatprep.subr.mxu0 0.0
    %57 = vmatpush1.msra.mxu0 0.0
    %58 = vmatprep.subr.mxu0 0.0
    %59 = vmatpush1.msra.mxu0 0.0
    %60 = vmatprep.subr.mxu0 0.0
    %61 = vmatpush1.msra.mxu0 0.0
    %62 = vmatprep.subr.mxu0 0.0
    %63 = vmatpush1.msra.mxu0 0.0
    %64 = vmatprep.subr.mxu0 0.0
    %65 = vmatpush1.msra.mxu0 0.0
    %66 = vmatprep.subr.mxu0 0.0
    %67 = vmatpush1.msra.mxu0 0.0
    %68 = vmatprep.subr.mxu0 0.0
    %69 = vmatpush1.msra.mxu0 0.0
    %70 = vmatprep.subr.mxu0 0.0
    %71 = vmatpush1.msra.mxu0 0.0
    %72 = vmatprep.subr.mxu0 0.0
    %73 = vmatpush1.msra.mxu0 0.0
    %74 = vmatprep.subr.mxu0 0.0
    %75 = vmatpush1.msra.mxu0 %v41
    %76 = vmatprep.subr.mxu0 0.0
    %77 = vmatpush1.msra.mxu0 %v40
    %78 = vmatprep.subr.mxu0 0.0
    %79 = vmatpush1.msra.mxu0 %v39
    %80 = vmatprep.subr.mxu0 0.0
    %81 = vmatpush1.msra.mxu0 %v38
    %82 = vmatprep.subr.mxu0 0.0
    %83 = vmatpush1.msra.mxu0 %v37
    %84 = vmatprep.subr.mxu0 0.0
    %85 = vmatpush1.msra.mxu0 %v36
    %86 = vmatprep.subr.mxu0 0.0
    %87 = vmatpush1.msra.mxu0 %v35
    %88 = vmatprep.subr.mxu0 0.0
    %89 = vmatpush2.msra.mxu0 0.0
    %90 = vmatprep.subr.mxu0 0.0
    %91 = vmatpush2.msra.mxu0 0.0
    %92 = vmatprep.subr.mxu0 0.0
    %93 = vmatpush2.msra.mxu0 0.0
    %94 = vmatprep.subr.mxu0 0.0
    %95 = vmatpush2.msra.mxu0 0.0
    %96 = vmatprep.subr.mxu0 0.0
    %97 = vmatpush2.msra.mxu0 0.0
    %98 = vmatprep.subr.mxu0 0.0
    %99 = vmatpush2.msra.mxu0 0.0
    %100 = vmatprep.subr.mxu0 0.0
    %101 = vmatpush2.msra.mxu0 0.0
    %102 = vmatprep.subr.mxu0 0.0
    %103 = vmatpush2.msra.mxu0 0.0
    %104 = vmatprep.subr.mxu0 0.0
    %105 = vmatpush2.msra.mxu0 0.0
    %106 = vmatprep.subr.mxu0 0.0
    %107 = vmatpush2.msra.mxu0 0.0
    %108 = vmatprep.subr.mxu0 0.0
    %109 = vmatpush2.msra.mxu0 0.0
    %110 = vmatprep.subr.mxu0 0.0
    %111 = vmatpush2.msra.mxu0 0.0
    %112 = vmatprep.subr.mxu0 0.0
    %113 = vmatpush2.msra.mxu0 0.0
    %114 = vmatprep.subr.mxu0 0.0
    %115 = vmatpush2.msra.mxu0 0.0
    %116 = vmatprep.subr.mxu0 0.0
    %117 = vmatpush2.msra.mxu0 0.0
    %118 = vmatprep.subr.mxu0 0.0
    %119 = vmatpush2.msra.mxu0 0.0
    %120 = vmatprep.mubr.f32.mxu0 0.0
    %121 = vmatmul.mubr.f32.gmra.mxu0 %v51
    %v122 = vpop.f32.mrf.mxu0
    %v123 = vadd.f32 %v47, %v122
    %v124 = vpop.f32.mrf.mxu0
    %125 = vmatprep.mubr.f32.mxu0 0.0
    %126 = vmatmul.mubr.f32.gmra.mxu0 %v54
    %v127 = vpop.f32.mrf.mxu0
    %v128 = vadd.f32 %v47, %v127
    %v129 = vpop.f32.mrf.mxu0
    %130 = vdwg.mxu0
    %vm131 = vcmp.gt.f32.partialorder %v123, 0.0
    %vm132 = vcmp.gt.f32.partialorder %v128, 0.0
    %v133 = vmul.f32 %v123, 1.442695
    %v134 = vpow.pop %v133
    %v135 = vmul.f32 %v128, 1.442695
    %v136 = vpow.pop %v135
    %v137 = vsub.f32 %v134, 1.0
    %v138 = vsub.f32 %v136, 1.0
    %v139 = vsel %vm131, %v123, %v137
    %v140 = vsel %vm132, %v128, %v138
    %v141 = vld [vmem:[%s3] sm:$0xff]
    %v142 = vld [vmem:[%s3 + $0x8] sm:$0xff]
    %v143 = vld [vmem:[%s3 + $0x10] sm:$0xff]
    %v144 = vld [vmem:[%s3 + $0x18] sm:$0xff]
    %v145 = vld [vmem:[%s4] sm:$0x1]
    %v147 = vlaneseq
    %v148 = vshrl.u32 %v147, 7
    %v149 = vsub.s32 0, %v148
    %v150 = vrot.slane %v145, %v149
    %vm152 = vcmask 261120
    %v154 = vsel %vm152, %v139, 0
    %v157 = vsel %vm152, %v140, 0
    %159 = vmatprep.subr.mxu0 0.0
    %160 = vmatpush1.msra.mxu0 0.0
    %161 = vmatprep.subr.mxu0 0.0
    %162 = vmatpush1.msra.mxu0 0.0
    %163 = vmatprep.subr.mxu0 0.0
    %164 = vmatpush1.msra.mxu0 0.0
    %165 = vmatprep.subr.mxu0 0.0
    %166 = vmatpush1.msra.mxu0 0.0
    %167 = vmatprep.subr.mxu0 0.0
    %168 = vmatpush1.msra.mxu0 0.0
    %169 = vmatprep.subr.mxu0 0.0
    %170 = vmatpush1.msra.mxu0 0.0
    %171 = vmatprep.subr.mxu0 0.0
    %172 = vmatpush1.msra.mxu0 0.0
    %173 = vmatprep.subr.mxu0 0.0
    %174 = vmatpush1.msra.mxu0 0.0
    %175 = vmatprep.subr.mxu0 0.0
    %176 = vmatpush1.msra.mxu0 0.0
    %177 = vmatprep.subr.mxu0 0.0
    %178 = vmatpush1.msra.mxu0 0.0
    %179 = vmatprep.subr.mxu0 0.0
    %180 = vmatpush1.msra.mxu0 0.0
    %181 = vmatprep.subr.mxu0 0.0
    %182 = vmatpush1.msra.mxu0 0.0
    %183 = vmatprep.subr.mxu0 0.0
    %184 = vmatpush1.msra.mxu0 %v144
    %185 = vmatprep.subr.mxu0 0.0
    %186 = vmatpush1.msra.mxu0 %v143
    %187 = vmatprep.subr.mxu0 0.0
    %188 = vmatpush1.msra.mxu0 %v142
    %189 = vmatprep.subr.mxu0 0.0
    %190 = vmatpush1.msra.mxu0 %v141
    %191 = vmatprep.subr.mxu0 0.0
    %192 = vmatpush2.msra.mxu0 0.0
    %193 = vmatprep.subr.mxu0 0.0
    %194 = vmatpush2.msra.mxu0 0.0
    %195 = vmatprep.subr.mxu0 0.0
    %196 = vmatpush2.msra.mxu0 0.0
    %197 = vmatprep.subr.mxu0 0.0
    %198 = vmatpush2.msra.mxu0 0.0
    %199 = vmatprep.subr.mxu0 0.0
    %200 = vmatpush2.msra.mxu0 0.0
    %201 = vmatprep.subr.mxu0 0.0
    %202 = vmatpush2.msra.mxu0 0.0
    %203 = vmatprep.subr.mxu0 0.0
    %204 = vmatpush2.msra.mxu0 0.0
    %205 = vmatprep.subr.mxu0 0.0
    %206 = vmatpush2.msra.mxu0 0.0
    %207 = vmatprep.subr.mxu0 0.0
    %208 = vmatpush2.msra.mxu0 0.0
    %209 = vmatprep.subr.mxu0 0.0
    %210 = vmatpush2.msra.mxu0 0.0
    %211 = vmatprep.subr.mxu0 0.0
    %212 = vmatpush2.msra.mxu0 0.0
    %213 = vmatprep.subr.mxu0 0.0
    %214 = vmatpush2.msra.mxu0 0.0
    %215 = vmatprep.subr.mxu0 0.0
    %216 = vmatpush2.msra.mxu0 0.0
    %217 = vmatprep.subr.mxu0 0.0
    %218 = vmatpush2.msra.mxu0 0.0
    %219 = vmatprep.subr.mxu0 0.0
    %220 = vmatpush2.msra.mxu0 0.0
    %221 = vmatprep.subr.mxu0 0.0
    %222 = vmatpush2.msra.mxu0 0.0
    %223 = vmatprep.mubr.f32.mxu0 0.0
    %224 = vmatmul.mubr.f32.gmra.mxu0 %v154
    %v225 = vpop.f32.mrf.mxu0
    %v226 = vadd.f32 %v150, %v225
    %v227 = vpop.f32.mrf.mxu0
    %228 = vmatprep.mubr.f32.mxu0 0.0
    %229 = vmatmul.mubr.f32.gmra.mxu0 %v157
    %v230 = vpop.f32.mrf.mxu0
    %v231 = vadd.f32 %v150, %v230
    %v232 = vpop.f32.mrf.mxu0
    %233 = vdwg.mxu0
    %v234 = vld [vmem:[%s5] sm:$0xff]
    %v235 = vld [vmem:[%s5 + $0x8] sm:$0xff]
    %v236 = vld [vmem:[%s5 + $0x10] sm:$0xff]
    %v237 = vld [vmem:[%s5 + $0x18] sm:$0xff]
    %v238 = vld [vmem:[%s6] sm:$0x1]
    %v240 = vlaneseq
    %v241 = vshrl.u32 %v240, 7
    %v242 = vsub.s32 0, %v241
    %v243 = vrot.slane %v238, %v242
    %v246 = vsel %vm152, %v226, 0
    %v249 = vsel %vm152, %v231, 0
    %251 = vmatprep.subr.mxu0 0.0
    %252 = vmatpush1.msra.mxu0 0.0
    %253 = vmatprep.subr.mxu0 0.0
    %254 = vmatpush1.msra.mxu0 0.0
    %255 = vmatprep.subr.mxu0 0.0
    %256 = vmatpush1.msra.mxu0 0.0
    %257 = vmatprep.subr.mxu0 0.0
    %258 = vmatpush1.msra.mxu0 0.0
    %259 = vmatprep.subr.mxu0 0.0
    %260 = vmatpush1.msra.mxu0 0.0
    %261 = vmatprep.subr.mxu0 0.0
    %262 = vmatpush1.msra.mxu0 0.0
    %263 = vmatprep.subr.mxu0 0.0
    %264 = vmatpush1.msra.mxu0 0.0
    %265 = vmatprep.subr.mxu0 0.0
    %266 = vmatpush1.msra.mxu0 0.0
    %267 = vmatprep.subr.mxu0 0.0
    %268 = vmatpush1.msra.mxu0 0.0
    %269 = vmatprep.subr.mxu0 0.0
    %270 = vmatpush1.msra.mxu0 0.0
    %271 = vmatprep.subr.mxu0 0.0
    %272 = vmatpush1.msra.mxu0 0.0
    %273 = vmatprep.subr.mxu0 0.0
    %274 = vmatpush1.msra.mxu0 0.0
    %275 = vmatprep.subr.mxu0 0.0
    %276 = vmatpush1.msra.mxu0 %v237
    %277 = vmatprep.subr.mxu0 0.0
    %278 = vmatpush1.msra.mxu0 %v236
    %279 = vmatprep.subr.mxu0 0.0
    %280 = vmatpush1.msra.mxu0 %v235
    %281 = vmatprep.subr.mxu0 0.0
    %282 = vmatpush1.msra.mxu0 %v234
    %283 = vmatprep.subr.mxu0 0.0
    %284 = vmatpush2.msra.mxu0 0.0
    %285 = vmatprep.subr.mxu0 0.0
    %286 = vmatpush2.msra.mxu0 0.0
    %287 = vmatprep.subr.mxu0 0.0
    %288 = vmatpush2.msra.mxu0 0.0
    %289 = vmatprep.subr.mxu0 0.0
    %290 = vmatpush2.msra.mxu0 0.0
    %291 = vmatprep.subr.mxu0 0.0
    %292 = vmatpush2.msra.mxu0 0.0
    %293 = vmatprep.subr.mxu0 0.0
    %294 = vmatpush2.msra.mxu0 0.0
    %295 = vmatprep.subr.mxu0 0.0
    %296 = vmatpush2.msra.mxu0 0.0
    %297 = vmatprep.subr.mxu0 0.0
    %298 = vmatpush2.msra.mxu0 0.0
    %299 = vmatprep.subr.mxu0 0.0
    %300 = vmatpush2.msra.mxu0 0.0
    %301 = vmatprep.subr.mxu0 0.0
    %302 = vmatpush2.msra.mxu0 0.0
    %303 = vmatprep.subr.mxu0 0.0
    %304 = vmatpush2.msra.mxu0 0.0
    %305 = vmatprep.subr.mxu0 0.0
    %306 = vmatpush2.msra.mxu0 0.0
    %307 = vmatprep.subr.mxu0 0.0
    %308 = vmatpush2.msra.mxu0 0.0
    %309 = vmatprep.subr.mxu0 0.0
    %310 = vmatpush2.msra.mxu0 0.0
    %311 = vmatprep.subr.mxu0 0.0
    %312 = vmatpush2.msra.mxu0 0.0
    %313 = vmatprep.subr.mxu0 0.0
    %314 = vmatpush2.msra.mxu0 0.0
    %315 = vmatprep.mubr.f32.mxu0 0.0
    %316 = vmatmul.mubr.f32.gmra.mxu0 %v246
    %v317 = vpop.f32.mrf.mxu0
    %v318 = vadd.f32 %v243, %v317
    %v319 = vpop.f32.mrf.mxu0
    %320 = vmatprep.mubr.f32.mxu0 0.0
    %321 = vmatmul.mubr.f32.gmra.mxu0 %v249
    %v322 = vpop.f32.mrf.mxu0
    %v323 = vadd.f32 %v243, %v322
    %v324 = vpop.f32.mrf.mxu0
    %325 = vdwg.mxu0
    %v326 = vxor.u32 %v318, 2147483648
    %v327 = vxor.u32 %v323, 2147483648
    %v328 = vmul.f32 %v326, 1.442695
    %v329 = vpow.pop %v328
    %v330 = vmul.f32 %v327, 1.442695
    %v331 = vpow.pop %v330
    %v332 = vadd.f32 %v329, 1.0
    %v333 = vadd.f32 %v331, 1.0
    %v334 = vrcp.pop %v332
    %v335 = vmul.f32 1.0, %v334
    %v336 = vrcp.pop %v333
    %v337 = vmul.f32 1.0, %v336
    %340 = vrot.lane.b32.xlu0 %v335, 112
    %v341 = vpop.permute.xlu0 %340
    %342 = vrot.lane.b32.xlu0 %v337, 112
    %v343 = vpop.permute.xlu0 %342
    %v346 = vmul.f32 %v318, %v341
    %v347 = vmul.f32 %v323, %v343
    %350 = vrot.lane.b32.xlu0 %v123, 96
    %v351 = vpop.permute.xlu0 %350
    %352 = vrot.lane.b32.xlu0 %v128, 96
    %v353 = vpop.permute.xlu0 %352
    %v356 = vadd.f32 %v346, %v351
    %v357 = vadd.f32 %v347, %v353
    %vm358 = vcmask 130048
    %v359 = vsel %vm358, %v356, 0.0
    %360 = vadd.xlane.f32.xlu0 %v359
    %v361 = vpop.xlane.xlu0 %360
    %v362 = vsel %vm358, %v357, 0.0
    %363 = vadd.xlane.f32.xlu0 %v362
    %v364 = vpop.xlane.xlu0 %363
    %v365 = vrcp.pop 16.0
    %v366 = vmul.f32 %v361, %v365
    %v367 = vmul.f32 %v364, %v365
    %v368 = vmul.f32 %v356, %v356
    %v369 = vmul.f32 %v357, %v357
    %v370 = vsel %vm358, %v368, 0.0
    %371 = vadd.xlane.f32.xlu0 %v370
    %v372 = vpop.xlane.xlu0 %371
    %v373 = vsel %vm358, %v369, 0.0
    %374 = vadd.xlane.f32.xlu0 %v373
    %v375 = vpop.xlane.xlu0 %374
    %v376 = vmul.f32 %v372, %v365
    %v377 = vmul.f32 %v375, %v365
    %v378 = vmul.f32 %v366, %v366
    %v379 = vmul.f32 %v367, %v367
    %v380 = vsub.f32 %v376, %v378
    %v381 = vsub.f32 %v377, %v379
    %v382 = vsub.f32 %v356, %v366
    %v383 = vsub.f32 %v357, %v367
    %v384 = vadd.f32 %v380, 0.001
    %v385 = vadd.f32 %v381, 0.001
    %v386 = vrsqrt.pop %v384
    %v387 = vrsqrt.pop %v385
    %v388 = vmul.f32 %v382, %v386
    %v389 = vmul.f32 %v383, %v387
    %v390 = vld [vmem:[%s7] sm:$0x1]
    %v392 = vlaneseq
    %v393 = vshrl.u32 %v392, 7
    %v394 = vsub.s32 0, %v393
    %v395 = vrot.slane %v390, %v394
    %v397 = vmul.f32 %v388, %v395
    %v398 = vmul.f32 %v389, %v395
    %v399 = vld [vmem:[%s8] sm:$0x1]
    %v401 = vlaneseq
    %v402 = vshrl.u32 %v401, 7
    %v403 = vsub.s32 0, %v402
    %v404 = vrot.slane %v399, %v403
    %v406 = vadd.f32 %v397, %v404
    %v407 = vadd.f32 %v398, %v404
    %408 = vst.msk [vmem:[#allocation2] sm:$0xff] %vm358, %v406
    %409 = vst.msk [vmem:[#allocation2 + $0x8] sm:$0xff] %vm358, %v407
    // Predicated region
    $region38: #{grn_forward.1} parent=1 // pred_check
      _
    $region39: #{grn_forward.1} parent=1 // pred_check_branch
      %411 = sbr.rel (0) target = $region41
    $region40: #{grn_forward.1} parent=1 // pred_region
      %s413 = ssub.s32 256, 256
      %414 = vsyncadd [#allocation3], %s413
      %s415 = sshll.u32 [#allocation2], 4
      %s416 = int_to_ptr.vmem [resolvable:$true] %s415
      %421 = dma.vmem_to_hbm [thread:$0]  %s416, 256, %s9, [#allocation3], 128, 128, 8
    $region41: #{grn_forward.1} parent=1 // pred_fallthru
      _
    // Predicated region
    $region42: #{grn_forward.1} parent=1 // pred_check
      _
    $region43: #{grn_forward.1} parent=1 // pred_check_branch
      %423 = sbr.rel (0) target = $region45
    $region44: #{grn_forward.1} parent=1 // pred_region
      %424 = dma.done [#allocation3], 256
    $region45: #{grn_forward.1} parent=1 // pred_fallthru
      _
    %425 = vsyncpa [#allocation3], 1

</llo_original>
